<compile_context>
chip_gen: v7x
topology: tpu7x:2x2x1
jax: 0.10.0
libtpu: 0.0.40
codegen_flags: <defaults>
</compile_context>

<pallas_src>
import jax
import jax.numpy as jnp
from jax.experimental import pallas as pl
from jax.experimental.pallas import tpu as pltpu

IMG_CH = 7      # netG output channels == onehot nc=7 in GANModel.onehot
D_IN_CH = 10    # 4 grouped channels + 6 selected image channels (discriminate)
LANE = 128


def _smem_spec():
    return pl.BlockSpec(memory_space=pltpu.MemorySpace.SMEM)


def _pick_ts(s):
    """Largest spatial tile (sublane rows of 128 lanes) that divides s."""
    for ts in (64, 48, 32, 16):          # multiples of 16 -> bf16/f32 tile safe
        if s % ts == 0:
            return ts
    return s                             # fall back to a full-extent block


# ----------------------------------------------------------------------------
# netG proxy: per-pixel 1x1 conv (ZC -> IMG_CH) logits with fused argmax.
# argmax(softmax(x)) == argmax(x), so _tolong works directly on the logits and
# inference never has to compute exp / normalize at all.
# ----------------------------------------------------------------------------
def _gen_logits_argmax(noise_ref, wg_ref, bg_ref, logits_scr):
    # TODO(synk): Generator architecture is not defined in gan_model.py; this is
    # a deterministic 1x1-conv (+ downstream channel softmax) proxy for netG.
    _, zc, ts, _ = noise_ref.shape
    m = None
    idx = None
    for k in range(IMG_CH):
        l = jnp.zeros((ts, LANE), jnp.float32) + bg_ref[k]
        for c in range(zc):
            l = l + wg_ref[c, k] * noise_ref[0, c].astype(jnp.float32)
        if logits_scr is not None:
            logits_scr[k] = l            # keep logits in VMEM scratch, not vregs
        if k == 0:
            m = l
            idx = jnp.zeros((ts, LANE), jnp.int32)
        else:
            better = l > m               # strict '>' == first-occurrence argmax
            m = jnp.where(better, l, m)
            idx = jnp.where(better, jnp.int32(k), idx)
    return m, idx


# ----------------------------------------------------------------------------
# Inference kernel: generator logits -> argmax cube only (no softmax, no netD).
# ----------------------------------------------------------------------------
def _infer_kernel(noise_ref, wg_ref, bg_ref, cube_ref):
    _, idx = _gen_logits_argmax(noise_ref, wg_ref, bg_ref, None)
    cube_ref[0, 0] = idx


# ----------------------------------------------------------------------------
# Fused training kernel: generator -> argmax -> softmax -> discriminate()
# preprocessing -> netD proxy -> hinge-loss partial sums.  All intermediates
# (logits/exp slab, concat channels, pred maps) stay in VMEM / vregs.
# ----------------------------------------------------------------------------
def _train_kernel(noise_ref, real_ref, wg_ref, bg_ref, wd_ref, bd_ref,
                  cube_ref, loss_ref, e_scr):
    s_id = pl.program_id(1)
    ts = noise_ref.shape[2]

    # ---- netG proxy logits (VMEM scratch) + fused argmax (_tolong) --------
    m, idx = _gen_logits_argmax(noise_ref, wg_ref, bg_ref, e_scr)
    cube_ref[0, 0] = idx

    # ---- channel softmax: overwrite scratch with exps, accumulate denom ---
    denom = jnp.zeros((ts, LANE), jnp.float32)
    for k in range(IMG_CH):
        e = jnp.exp(e_scr[k] - m)
        e_scr[k] = e
        denom = denom + e
    inv = pl.reciprocal(denom, approx=True)      # EUP reciprocal, ~free slot

    def p(k):                                    # fake_image channel k (prob)
        return e_scr[k] * inv

    # ---- discriminate(): fake_concat channels + netD proxy ----------------
    # TODO(synk): HybridDiscriminator is not defined in gan_model.py; netD is a
    # deterministic per-pixel linear (1x1-conv, 10 -> 1) proxy.
    bd0 = bd_ref[0]
    fg1_0 = p(0) + p(1) + p(2) + p(6)            # group_G(fake,[1,2,3,7],[4,5])[0]
    fg1_1 = p(3) + p(4)                          # group_G(fake,[1,2,3,7],[4,5])[1]
    fg2_0 = p(2) + p(6)                          # group_G(fake,[3,7],[1,2])[0]
    fg2_1 = p(0) + p(1)                          # group_G(fake,[3,7],[1,2])[1]
    pred_fake = (bd0
                 + wd_ref[0] * fg1_0 + wd_ref[1] * fg1_1
                 + wd_ref[2] * fg2_0 + wd_ref[3] * fg2_1
                 + wd_ref[4] * p(0) + wd_ref[5] * p(1) + wd_ref[6] * p(2)
                 + wd_ref[7] * p(3) + wd_ref[8] * p(4) + wd_ref[9] * p(6))

    # ---- discriminate(): real_concat channels + netD proxy ----------------
    real = real_ref[0, 0]                        # (ts, 128) f32 labels 0..6
    rp1 = real + 1.0
    one = jnp.ones((ts, LANE), jnp.float32)
    zero = jnp.zeros((ts, LANE), jnp.float32)

    def member(x, vals):                         # group(): membership indicator
        g = zero
        for v in vals:
            g = jnp.where(x == v, one, g)
        return g

    def onehot(ch):                              # onehot(real) channel ch
        return jnp.where(real == float(ch), one, zero)

    rg1_0 = member(rp1, (1.0, 2.0, 3.0, 7.0))    # group(real+1,[1,2,3,7],[4,5])[0]
    rg1_1 = member(rp1, (4.0, 5.0))
    rg2_0 = member(rp1, (3.0, 7.0))              # group(real+1,[3,7],[1,2])[0]
    rg2_1 = member(rp1, (1.0, 2.0))
    pred_real = (bd0
                 + wd_ref[0] * rg1_0 + wd_ref[1] * rg1_1
                 + wd_ref[2] * rg2_0 + wd_ref[3] * rg2_1
                 + wd_ref[4] * onehot(0) + wd_ref[5] * onehot(1)
                 + wd_ref[6] * onehot(2) + wd_ref[7] * onehot(3)
                 + wd_ref[8] * onehot(4) + wd_ref[9] * onehot(6))

    # ---- hinge GAN loss: lane-wise partial sums, accumulated per batch ----
    @pl.when(s_id == 0)
    def _init():
        loss_ref[...] = jnp.zeros_like(loss_ref)

    loss_ref[0, 0] += jnp.sum(pred_fake, axis=0, keepdims=True)          # G:-mean
    loss_ref[0, 1] += jnp.sum(jnp.maximum(1.0 + pred_fake, 0.0), axis=0,
                              keepdims=True)                             # D_Fake
    loss_ref[0, 2] += jnp.sum(jnp.maximum(1.0 - pred_real, 0.0), axis=0,
                              keepdims=True)                             # D_real


# ----------------------------------------------------------------------------
# pallas_call wrappers
# ----------------------------------------------------------------------------
def _infer_call(noise_r, params, ts):
    B, zc, S, _ = noise_r.shape
    ns = S // ts
    noise_spec = pl.BlockSpec((1, zc, ts, LANE), lambda b, s: (b, 0, s, 0))
    cube_spec = pl.BlockSpec((1, 1, ts, LANE), lambda b, s: (b, 0, s, 0))
    return pl.pallas_call(
        _infer_kernel,
        out_shape=jax.ShapeDtypeStruct((B, 1, S, LANE), jnp.int32),
        grid=(B, ns),
        in_specs=[noise_spec, _smem_spec(), _smem_spec()],
        out_specs=cube_spec,
        compiler_params=pltpu.CompilerParams(
            dimension_semantics=("parallel", "parallel"),
            vmem_limit_bytes=32 * 1024 * 1024),
    )(noise_r, params["wg"], params["bg"])


def _train_call(noise_r, real_r, params, ts):
    B, zc, S, _ = noise_r.shape
    ns = S // ts
    noise_spec = pl.BlockSpec((1, zc, ts, LANE), lambda b, s: (b, 0, s, 0))
    real_spec = pl.BlockSpec((1, 1, ts, LANE), lambda b, s: (b, 0, s, 0))
    cube_spec = pl.BlockSpec((1, 1, ts, LANE), lambda b, s: (b, 0, s, 0))
    loss_spec = pl.BlockSpec((1, 3, 1, LANE), lambda b, s: (b, 0, 0, 0))
    return pl.pallas_call(
        _train_kernel,
        out_shape=(jax.ShapeDtypeStruct((B, 1, S, LANE), jnp.int32),
                   jax.ShapeDtypeStruct((B, 3, 1, LANE), jnp.float32)),
        grid=(B, ns),
        in_specs=[noise_spec, real_spec,
                  _smem_spec(), _smem_spec(), _smem_spec(), _smem_spec()],
        out_specs=(cube_spec, loss_spec),
        scratch_shapes=[pltpu.VMEM((IMG_CH, ts, LANE), jnp.float32)],
        compiler_params=pltpu.CompilerParams(
            dimension_semantics=("parallel", "arbitrary"),
            vmem_limit_bytes=32 * 1024 * 1024),
    )(noise_r, real_r, params["wg"], params["bg"], params["wd"], params["bd"])


# ----------------------------------------------------------------------------
# Parameter init (deterministic, synthetic) and GANModel.forward wrapper
# ----------------------------------------------------------------------------
def init_params(key, z_ch=4):
    k1, k2 = jax.random.split(key, 2)
    return {
        "wg": 0.5 * jax.random.normal(k1, (z_ch, IMG_CH), jnp.float32),
        "bg": jnp.zeros((IMG_CH,), jnp.float32),
        "wd": 0.5 * jax.random.normal(k2, (D_IN_CH,), jnp.float32),
        "bd": jnp.zeros((1,), jnp.float32),
    }


def gan_model_forward(noise, data, mode, params):
    real_image = data["image"]                   # (B, 1, H, W) labels 0..6
    B, zc, H, W = noise.shape
    hw = H * W
    assert hw % LANE == 0, "H*W must be a multiple of 128"
    S = hw // LANE
    ts = _pick_ts(S)

    # bf16 HBM I/O for activations; label map stays f32 (exact compares).
    noise_r = noise.reshape(B, zc, S, LANE).astype(jnp.bfloat16)

    if mode == "inference":
        cube = _infer_call(noise_r, params, ts)
        return cube.reshape(B, 1, H, W)

    real_r = real_image.reshape(B, 1, S, LANE).astype(jnp.float32)
    cube, loss_sums = _train_call(noise_r, real_r, params, ts)
    fake_cube = cube.reshape(B, 1, H, W)
    tot = jnp.sum(loss_sums, axis=(0, 2, 3))     # finalize tiny partial sums
    n = jnp.float32(B * hw)

    if mode == "generator":
        g_losses = {"GAN": -tot[0] / n}          # hinge G loss: -mean(pred_fake)
        return g_losses, fake_cube
    elif mode == "discriminator":
        d_losses = {"D_Fake": tot[1] / n,        # mean(relu(1 + pred_fake))
                    "D_real": tot[2] / n}        # mean(relu(1 - pred_real))
        # TODO(synk): gradient penalty (D_GP) needs autograd through netD
        # (torch.autograd.grad over an undefined discriminator); omitted.
        return d_losses
    else:
        raise ValueError(mode)


if __name__ == "__main__":
    key = jax.random.PRNGKey(0)
    kn, kr, kp = jax.random.split(key, 3)

    B, ZC, H, W = 2, 4, 16, 16
    noise = jax.random.normal(kn, (B, ZC, H, W), jnp.float32)
    real = jax.random.randint(kr, (B, 1, H, W), 0, IMG_CH).astype(jnp.float32)
    data = {"image": real}
    params = init_params(kp, z_ch=ZC)

    fake_cube = gan_model_forward(noise, data, "inference", params)
    g_losses, generated = gan_model_forward(noise, data, "generator", params)
    d_losses = gan_model_forward(noise, data, "discriminator", params)

    jax.block_until_ready((fake_cube, g_losses, generated, d_losses))
    print("KERNEL_OK")
</pallas_src>

<mosaic_0001>
module attributes {stable_mosaic.version = 11 : i64} {
  func.func @_infer_kernel(%arg0: i32, %arg1: i32, %arg2: memref<1x4x2x128xbf16, #tpu.memory_space<vmem>>, %arg3: memref<4x7xf32, #tpu.memory_space<smem>>, %arg4: memref<7xf32, #tpu.memory_space<smem>>, %arg5: memref<1x1x2x128xi32, #tpu.memory_space<vmem>>) attributes {dimension_semantics = [#tpu.dimension_semantics<parallel>, #tpu.dimension_semantics<parallel>], iteration_bounds = array<i64: 2, 1>, scalar_prefetch = 0 : i64, scratch_operands = 0 : i64, tpu.core_type = #tpu.core_type<tc>, window_params = [{transform_indices = @transform_0, window_bounds = array<i64: 1, 4, 2, 128>}, {transform_indices = @transform_1, window_bounds = array<i64: 4, 7>}, {transform_indices = @transform_2, window_bounds = array<i64: 7>}, {transform_indices = @transform_3, window_bounds = array<i64: 1, 1, 2, 128>}]} {
    %cst = arith.constant 0.000000e+00 : f32
    %0 = vector.broadcast %cst : f32 to vector<2x128xf32>
    %c0 = arith.constant 0 : index
    %1 = memref.load %arg4[%c0] : memref<7xf32, #tpu.memory_space<smem>>
    %2 = vector.broadcast %1 : f32 to vector<2x128xf32>
    %3 = arith.addf %0, %2 : vector<2x128xf32>
    %c0_0 = arith.constant 0 : index
    %c0_1 = arith.constant 0 : index
    %4 = memref.load %arg3[%c0_0, %c0_1] : memref<4x7xf32, #tpu.memory_space<smem>>
    %c0_2 = arith.constant 0 : index
    %c0_3 = arith.constant 0 : index
    %c0_4 = arith.constant 0 : index
    %c0_5 = arith.constant 0 : index
    %5 = vector.load %arg2[%c0_2, %c0_3, %c0_4, %c0_5] : memref<1x4x2x128xbf16, #tpu.memory_space<vmem>>, vector<1x1x2x128xbf16>
    %6 = vector.shape_cast %5 : vector<1x1x2x128xbf16> to vector<2x128xbf16>
    %7 = arith.extf %6 : vector<2x128xbf16> to vector<2x128xf32>
    %8 = vector.broadcast %4 : f32 to vector<2x128xf32>
    %9 = arith.mulf %8, %7 : vector<2x128xf32>
    %10 = arith.addf %3, %9 : vector<2x128xf32>
    %c1 = arith.constant 1 : index
    %c0_6 = arith.constant 0 : index
    %11 = memref.load %arg3[%c1, %c0_6] : memref<4x7xf32, #tpu.memory_space<smem>>
    %c0_7 = arith.constant 0 : index
    %c1_8 = arith.constant 1 : index
    %c0_9 = arith.constant 0 : index
    %c0_10 = arith.constant 0 : index
    %12 = vector.load %arg2[%c0_7, %c1_8, %c0_9, %c0_10] : memref<1x4x2x128xbf16, #tpu.memory_space<vmem>>, vector<1x1x2x128xbf16>
    %13 = vector.shape_cast %12 : vector<1x1x2x128xbf16> to vector<2x128xbf16>
    %14 = arith.extf %13 : vector<2x128xbf16> to vector<2x128xf32>
    %15 = vector.broadcast %11 : f32 to vector<2x128xf32>
    %16 = arith.mulf %15, %14 : vector<2x128xf32>
    %17 = arith.addf %10, %16 : vector<2x128xf32>
    %c2 = arith.constant 2 : index
    %c0_11 = arith.constant 0 : index
    %18 = memref.load %arg3[%c2, %c0_11] : memref<4x7xf32, #tpu.memory_space<smem>>
    %c0_12 = arith.constant 0 : index
    %c2_13 = arith.constant 2 : index
    %c0_14 = arith.constant 0 : index
    %c0_15 = arith.constant 0 : index
    %19 = vector.load %arg2[%c0_12, %c2_13, %c0_14, %c0_15] : memref<1x4x2x128xbf16, #tpu.memory_space<vmem>>, vector<1x1x2x128xbf16>
    %20 = vector.shape_cast %19 : vector<1x1x2x128xbf16> to vector<2x128xbf16>
    %21 = arith.extf %20 : vector<2x128xbf16> to vector<2x128xf32>
    %22 = vector.broadcast %18 : f32 to vector<2x128xf32>
    %23 = arith.mulf %22, %21 : vector<2x128xf32>
    %24 = arith.addf %17, %23 : vector<2x128xf32>
    %c3 = arith.constant 3 : index
    %c0_16 = arith.constant 0 : index
    %25 = memref.load %arg3[%c3, %c0_16] : memref<4x7xf32, #tpu.memory_space<smem>>
    %c0_17 = arith.constant 0 : index
    %c3_18 = arith.constant 3 : index
    %c0_19 = arith.constant 0 : index
    %c0_20 = arith.constant 0 : index
    %26 = vector.load %arg2[%c0_17, %c3_18, %c0_19, %c0_20] : memref<1x4x2x128xbf16, #tpu.memory_space<vmem>>, vector<1x1x2x128xbf16>
    %27 = vector.shape_cast %26 : vector<1x1x2x128xbf16> to vector<2x128xbf16>
    %28 = arith.extf %27 : vector<2x128xbf16> to vector<2x128xf32>
    %29 = vector.broadcast %25 : f32 to vector<2x128xf32>
    %30 = arith.mulf %29, %28 : vector<2x128xf32>
    %31 = arith.addf %24, %30 : vector<2x128xf32>
    %c0_i32 = arith.constant 0 : i32
    %32 = vector.broadcast %c0_i32 : i32 to vector<2x128xi32>
    %cst_21 = arith.constant 0.000000e+00 : f32
    %33 = vector.broadcast %cst_21 : f32 to vector<2x128xf32>
    %c1_22 = arith.constant 1 : index
    %34 = memref.load %arg4[%c1_22] : memref<7xf32, #tpu.memory_space<smem>>
    %35 = vector.broadcast %34 : f32 to vector<2x128xf32>
    %36 = arith.addf %33, %35 : vector<2x128xf32>
    %c0_23 = arith.constant 0 : index
    %c1_24 = arith.constant 1 : index
    %37 = memref.load %arg3[%c0_23, %c1_24] : memref<4x7xf32, #tpu.memory_space<smem>>
    %c0_25 = arith.constant 0 : index
    %c0_26 = arith.constant 0 : index
    %c0_27 = arith.constant 0 : index
    %c0_28 = arith.constant 0 : index
    %38 = vector.load %arg2[%c0_25, %c0_26, %c0_27, %c0_28] : memref<1x4x2x128xbf16, #tpu.memory_space<vmem>>, vector<1x1x2x128xbf16>
    %39 = vector.shape_cast %38 : vector<1x1x2x128xbf16> to vector<2x128xbf16>
    %40 = arith.extf %39 : vector<2x128xbf16> to vector<2x128xf32>
    %41 = vector.broadcast %37 : f32 to vector<2x128xf32>
    %42 = arith.mulf %41, %40 : vector<2x128xf32>
    %43 = arith.addf %36, %42 : vector<2x128xf32>
    %c1_29 = arith.constant 1 : index
    %c1_30 = arith.constant 1 : index
    %44 = memref.load %arg3[%c1_29, %c1_30] : memref<4x7xf32, #tpu.memory_space<smem>>
    %c0_31 = arith.constant 0 : index
    %c1_32 = arith.constant 1 : index
    %c0_33 = arith.constant 0 : index
    %c0_34 = arith.constant 0 : index
    %45 = vector.load %arg2[%c0_31, %c1_32, %c0_33, %c0_34] : memref<1x4x2x128xbf16, #tpu.memory_space<vmem>>, vector<1x1x2x128xbf16>
    %46 = vector.shape_cast %45 : vector<1x1x2x128xbf16> to vector<2x128xbf16>
    %47 = arith.extf %46 : vector<2x128xbf16> to vector<2x128xf32>
    %48 = vector.broadcast %44 : f32 to vector<2x128xf32>
    %49 = arith.mulf %48, %47 : vector<2x128xf32>
    %50 = arith.addf %43, %49 : vector<2x128xf32>
    %c2_35 = arith.constant 2 : index
    %c1_36 = arith.constant 1 : index
    %51 = memref.load %arg3[%c2_35, %c1_36] : memref<4x7xf32, #tpu.memory_space<smem>>
    %c0_37 = arith.constant 0 : index
    %c2_38 = arith.constant 2 : index
    %c0_39 = arith.constant 0 : index
    %c0_40 = arith.constant 0 : index
    %52 = vector.load %arg2[%c0_37, %c2_38, %c0_39, %c0_40] : memref<1x4x2x128xbf16, #tpu.memory_space<vmem>>, vector<1x1x2x128xbf16>
    %53 = vector.shape_cast %52 : vector<1x1x2x128xbf16> to vector<2x128xbf16>
    %54 = arith.extf %53 : vector<2x128xbf16> to vector<2x128xf32>
    %55 = vector.broadcast %51 : f32 to vector<2x128xf32>
    %56 = arith.mulf %55, %54 : vector<2x128xf32>
    %57 = arith.addf %50, %56 : vector<2x128xf32>
    %c3_41 = arith.constant 3 : index
    %c1_42 = arith.constant 1 : index
    %58 = memref.load %arg3[%c3_41, %c1_42] : memref<4x7xf32, #tpu.memory_space<smem>>
    %c0_43 = arith.constant 0 : index
    %c3_44 = arith.constant 3 : index
    %c0_45 = arith.constant 0 : index
    %c0_46 = arith.constant 0 : index
    %59 = vector.load %arg2[%c0_43, %c3_44, %c0_45, %c0_46] : memref<1x4x2x128xbf16, #tpu.memory_space<vmem>>, vector<1x1x2x128xbf16>
    %60 = vector.shape_cast %59 : vector<1x1x2x128xbf16> to vector<2x128xbf16>
    %61 = arith.extf %60 : vector<2x128xbf16> to vector<2x128xf32>
    %62 = vector.broadcast %58 : f32 to vector<2x128xf32>
    %63 = arith.mulf %62, %61 : vector<2x128xf32>
    %64 = arith.addf %57, %63 : vector<2x128xf32>
    %65 = arith.cmpf ogt, %64, %31 : vector<2x128xf32>
    %66 = arith.select %65, %64, %31 : vector<2x128xi1>, vector<2x128xf32>
    %c1_i32 = arith.constant 1 : i32
    %67 = vector.broadcast %c1_i32 : i32 to vector<2x128xi32>
    %68 = arith.select %65, %67, %32 : vector<2x128xi1>, vector<2x128xi32>
    %cst_47 = arith.constant 0.000000e+00 : f32
    %69 = vector.broadcast %cst_47 : f32 to vector<2x128xf32>
    %c2_48 = arith.constant 2 : index
    %70 = memref.load %arg4[%c2_48] : memref<7xf32, #tpu.memory_space<smem>>
    %71 = vector.broadcast %70 : f32 to vector<2x128xf32>
    %72 = arith.addf %69, %71 : vector<2x128xf32>
    %c0_49 = arith.constant 0 : index
    %c2_50 = arith.constant 2 : index
    %73 = memref.load %arg3[%c0_49, %c2_50] : memref<4x7xf32, #tpu.memory_space<smem>>
    %c0_51 = arith.constant 0 : index
    %c0_52 = arith.constant 0 : index
    %c0_53 = arith.constant 0 : index
    %c0_54 = arith.constant 0 : index
    %74 = vector.load %arg2[%c0_51, %c0_52, %c0_53, %c0_54] : memref<1x4x2x128xbf16, #tpu.memory_space<vmem>>, vector<1x1x2x128xbf16>
    %75 = vector.shape_cast %74 : vector<1x1x2x128xbf16> to vector<2x128xbf16>
    %76 = arith.extf %75 : vector<2x128xbf16> to vector<2x128xf32>
    %77 = vector.broadcast %73 : f32 to vector<2x128xf32>
    %78 = arith.mulf %77, %76 : vector<2x128xf32>
    %79 = arith.addf %72, %78 : vector<2x128xf32>
    %c1_55 = arith.constant 1 : index
    %c2_56 = arith.constant 2 : index
    %80 = memref.load %arg3[%c1_55, %c2_56] : memref<4x7xf32, #tpu.memory_space<smem>>
    %c0_57 = arith.constant 0 : index
    %c1_58 = arith.constant 1 : index
    %c0_59 = arith.constant 0 : index
    %c0_60 = arith.constant 0 : index
    %81 = vector.load %arg2[%c0_57, %c1_58, %c0_59, %c0_60] : memref<1x4x2x128xbf16, #tpu.memory_space<vmem>>, vector<1x1x2x128xbf16>
    %82 = vector.shape_cast %81 : vector<1x1x2x128xbf16> to vector<2x128xbf16>
    %83 = arith.extf %82 : vector<2x128xbf16> to vector<2x128xf32>
    %84 = vector.broadcast %80 : f32 to vector<2x128xf32>
    %85 = arith.mulf %84, %83 : vector<2x128xf32>
    %86 = arith.addf %79, %85 : vector<2x128xf32>
    %c2_61 = arith.constant 2 : index
    %c2_62 = arith.constant 2 : index
    %87 = memref.load %arg3[%c2_61, %c2_62] : memref<4x7xf32, #tpu.memory_space<smem>>
    %c0_63 = arith.constant 0 : index
    %c2_64 = arith.constant 2 : index
    %c0_65 = arith.constant 0 : index
    %c0_66 = arith.constant 0 : index
    %88 = vector.load %arg2[%c0_63, %c2_64, %c0_65, %c0_66] : memref<1x4x2x128xbf16, #tpu.memory_space<vmem>>, vector<1x1x2x128xbf16>
    %89 = vector.shape_cast %88 : vector<1x1x2x128xbf16> to vector<2x128xbf16>
    %90 = arith.extf %89 : vector<2x128xbf16> to vector<2x128xf32>
    %91 = vector.broadcast %87 : f32 to vector<2x128xf32>
    %92 = arith.mulf %91, %90 : vector<2x128xf32>
    %93 = arith.addf %86, %92 : vector<2x128xf32>
    %c3_67 = arith.constant 3 : index
    %c2_68 = arith.constant 2 : index
    %94 = memref.load %arg3[%c3_67, %c2_68] : memref<4x7xf32, #tpu.memory_space<smem>>
    %c0_69 = arith.constant 0 : index
    %c3_70 = arith.constant 3 : index
    %c0_71 = arith.constant 0 : index
    %c0_72 = arith.constant 0 : index
    %95 = vector.load %arg2[%c0_69, %c3_70, %c0_71, %c0_72] : memref<1x4x2x128xbf16, #tpu.memory_space<vmem>>, vector<1x1x2x128xbf16>
    %96 = vector.shape_cast %95 : vector<1x1x2x128xbf16> to vector<2x128xbf16>
    %97 = arith.extf %96 : vector<2x128xbf16> to vector<2x128xf32>
    %98 = vector.broadcast %94 : f32 to vector<2x128xf32>
    %99 = arith.mulf %98, %97 : vector<2x128xf32>
    %100 = arith.addf %93, %99 : vector<2x128xf32>
    %101 = arith.cmpf ogt, %100, %66 : vector<2x128xf32>
    %102 = arith.select %101, %100, %66 : vector<2x128xi1>, vector<2x128xf32>
    %c2_i32 = arith.constant 2 : i32
    %103 = vector.broadcast %c2_i32 : i32 to vector<2x128xi32>
    %104 = arith.select %101, %103, %68 : vector<2x128xi1>, vector<2x128xi32>
    %cst_73 = arith.constant 0.000000e+00 : f32
    %105 = vector.broadcast %cst_73 : f32 to vector<2x128xf32>
    %c3_74 = arith.constant 3 : index
    %106 = memref.load %arg4[%c3_74] : memref<7xf32, #tpu.memory_space<smem>>
    %107 = vector.broadcast %106 : f32 to vector<2x128xf32>
    %108 = arith.addf %105, %107 : vector<2x128xf32>
    %c0_75 = arith.constant 0 : index
    %c3_76 = arith.constant 3 : index
    %109 = memref.load %arg3[%c0_75, %c3_76] : memref<4x7xf32, #tpu.memory_space<smem>>
    %c0_77 = arith.constant 0 : index
    %c0_78 = arith.constant 0 : index
    %c0_79 = arith.constant 0 : index
    %c0_80 = arith.constant 0 : index
    %110 = vector.load %arg2[%c0_77, %c0_78, %c0_79, %c0_80] : memref<1x4x2x128xbf16, #tpu.memory_space<vmem>>, vector<1x1x2x128xbf16>
    %111 = vector.shape_cast %110 : vector<1x1x2x128xbf16> to vector<2x128xbf16>
    %112 = arith.extf %111 : vector<2x128xbf16> to vector<2x128xf32>
    %113 = vector.broadcast %109 : f32 to vector<2x128xf32>
    %114 = arith.mulf %113, %112 : vector<2x128xf32>
    %115 = arith.addf %108, %114 : vector<2x128xf32>
    %c1_81 = arith.constant 1 : index
    %c3_82 = arith.constant 3 : index
    %116 = memref.load %arg3[%c1_81, %c3_82] : memref<4x7xf32, #tpu.memory_space<smem>>
    %c0_83 = arith.constant 0 : index
    %c1_84 = arith.constant 1 : index
    %c0_85 = arith.constant 0 : index
    %c0_86 = arith.constant 0 : index
    %117 = vector.load %arg2[%c0_83, %c1_84, %c0_85, %c0_86] : memref<1x4x2x128xbf16, #tpu.memory_space<vmem>>, vector<1x1x2x128xbf16>
    %118 = vector.shape_cast %117 : vector<1x1x2x128xbf16> to vector<2x128xbf16>
    %119 = arith.extf %118 : vector<2x128xbf16> to vector<2x128xf32>
    %120 = vector.broadcast %116 : f32 to vector<2x128xf32>
    %121 = arith.mulf %120, %119 : vector<2x128xf32>
    %122 = arith.addf %115, %121 : vector<2x128xf32>
    %c2_87 = arith.constant 2 : index
    %c3_88 = arith.constant 3 : index
    %123 = memref.load %arg3[%c2_87, %c3_88] : memref<4x7xf32, #tpu.memory_space<smem>>
    %c0_89 = arith.constant 0 : index
    %c2_90 = arith.constant 2 : index
    %c0_91 = arith.constant 0 : index
    %c0_92 = arith.constant 0 : index
    %124 = vector.load %arg2[%c0_89, %c2_90, %c0_91, %c0_92] : memref<1x4x2x128xbf16, #tpu.memory_space<vmem>>, vector<1x1x2x128xbf16>
    %125 = vector.shape_cast %124 : vector<1x1x2x128xbf16> to vector<2x128xbf16>
    %126 = arith.extf %125 : vector<2x128xbf16> to vector<2x128xf32>
    %127 = vector.broadcast %123 : f32 to vector<2x128xf32>
    %128 = arith.mulf %127, %126 : vector<2x128xf32>
    %129 = arith.addf %122, %128 : vector<2x128xf32>
    %c3_93 = arith.constant 3 : index
    %c3_94 = arith.constant 3 : index
    %130 = memref.load %arg3[%c3_93, %c3_94] : memref<4x7xf32, #tpu.memory_space<smem>>
    %c0_95 = arith.constant 0 : index
    %c3_96 = arith.constant 3 : index
    %c0_97 = arith.constant 0 : index
    %c0_98 = arith.constant 0 : index
    %131 = vector.load %arg2[%c0_95, %c3_96, %c0_97, %c0_98] : memref<1x4x2x128xbf16, #tpu.memory_space<vmem>>, vector<1x1x2x128xbf16>
    %132 = vector.shape_cast %131 : vector<1x1x2x128xbf16> to vector<2x128xbf16>
    %133 = arith.extf %132 : vector<2x128xbf16> to vector<2x128xf32>
    %134 = vector.broadcast %130 : f32 to vector<2x128xf32>
    %135 = arith.mulf %134, %133 : vector<2x128xf32>
    %136 = arith.addf %129, %135 : vector<2x128xf32>
    %137 = arith.cmpf ogt, %136, %102 : vector<2x128xf32>
    %138 = arith.select %137, %136, %102 : vector<2x128xi1>, vector<2x128xf32>
    %c3_i32 = arith.constant 3 : i32
    %139 = vector.broadcast %c3_i32 : i32 to vector<2x128xi32>
    %140 = arith.select %137, %139, %104 : vector<2x128xi1>, vector<2x128xi32>
    %cst_99 = arith.constant 0.000000e+00 : f32
    %141 = vector.broadcast %cst_99 : f32 to vector<2x128xf32>
    %c4 = arith.constant 4 : index
    %142 = memref.load %arg4[%c4] : memref<7xf32, #tpu.memory_space<smem>>
    %143 = vector.broadcast %142 : f32 to vector<2x128xf32>
    %144 = arith.addf %141, %143 : vector<2x128xf32>
    %c0_100 = arith.constant 0 : index
    %c4_101 = arith.constant 4 : index
    %145 = memref.load %arg3[%c0_100, %c4_101] : memref<4x7xf32, #tpu.memory_space<smem>>
    %c0_102 = arith.constant 0 : index
    %c0_103 = arith.constant 0 : index
    %c0_104 = arith.constant 0 : index
    %c0_105 = arith.constant 0 : index
    %146 = vector.load %arg2[%c0_102, %c0_103, %c0_104, %c0_105] : memref<1x4x2x128xbf16, #tpu.memory_space<vmem>>, vector<1x1x2x128xbf16>
    %147 = vector.shape_cast %146 : vector<1x1x2x128xbf16> to vector<2x128xbf16>
    %148 = arith.extf %147 : vector<2x128xbf16> to vector<2x128xf32>
    %149 = vector.broadcast %145 : f32 to vector<2x128xf32>
    %150 = arith.mulf %149, %148 : vector<2x128xf32>
    %151 = arith.addf %144, %150 : vector<2x128xf32>
    %c1_106 = arith.constant 1 : index
    %c4_107 = arith.constant 4 : index
    %152 = memref.load %arg3[%c1_106, %c4_107] : memref<4x7xf32, #tpu.memory_space<smem>>
    %c0_108 = arith.constant 0 : index
    %c1_109 = arith.constant 1 : index
    %c0_110 = arith.constant 0 : index
    %c0_111 = arith.constant 0 : index
    %153 = vector.load %arg2[%c0_108, %c1_109, %c0_110, %c0_111] : memref<1x4x2x128xbf16, #tpu.memory_space<vmem>>, vector<1x1x2x128xbf16>
    %154 = vector.shape_cast %153 : vector<1x1x2x128xbf16> to vector<2x128xbf16>
    %155 = arith.extf %154 : vector<2x128xbf16> to vector<2x128xf32>
    %156 = vector.broadcast %152 : f32 to vector<2x128xf32>
    %157 = arith.mulf %156, %155 : vector<2x128xf32>
    %158 = arith.addf %151, %157 : vector<2x128xf32>
    %c2_112 = arith.constant 2 : index
    %c4_113 = arith.constant 4 : index
    %159 = memref.load %arg3[%c2_112, %c4_113] : memref<4x7xf32, #tpu.memory_space<smem>>
    %c0_114 = arith.constant 0 : index
    %c2_115 = arith.constant 2 : index
    %c0_116 = arith.constant 0 : index
    %c0_117 = arith.constant 0 : index
    %160 = vector.load %arg2[%c0_114, %c2_115, %c0_116, %c0_117] : memref<1x4x2x128xbf16, #tpu.memory_space<vmem>>, vector<1x1x2x128xbf16>
    %161 = vector.shape_cast %160 : vector<1x1x2x128xbf16> to vector<2x128xbf16>
    %162 = arith.extf %161 : vector<2x128xbf16> to vector<2x128xf32>
    %163 = vector.broadcast %159 : f32 to vector<2x128xf32>
    %164 = arith.mulf %163, %162 : vector<2x128xf32>
    %165 = arith.addf %158, %164 : vector<2x128xf32>
    %c3_118 = arith.constant 3 : index
    %c4_119 = arith.constant 4 : index
    %166 = memref.load %arg3[%c3_118, %c4_119] : memref<4x7xf32, #tpu.memory_space<smem>>
    %c0_120 = arith.constant 0 : index
    %c3_121 = arith.constant 3 : index
    %c0_122 = arith.constant 0 : index
    %c0_123 = arith.constant 0 : index
    %167 = vector.load %arg2[%c0_120, %c3_121, %c0_122, %c0_123] : memref<1x4x2x128xbf16, #tpu.memory_space<vmem>>, vector<1x1x2x128xbf16>
    %168 = vector.shape_cast %167 : vector<1x1x2x128xbf16> to vector<2x128xbf16>
    %169 = arith.extf %168 : vector<2x128xbf16> to vector<2x128xf32>
    %170 = vector.broadcast %166 : f32 to vector<2x128xf32>
    %171 = arith.mulf %170, %169 : vector<2x128xf32>
    %172 = arith.addf %165, %171 : vector<2x128xf32>
    %173 = arith.cmpf ogt, %172, %138 : vector<2x128xf32>
    %174 = arith.select %173, %172, %138 : vector<2x128xi1>, vector<2x128xf32>
    %c4_i32 = arith.constant 4 : i32
    %175 = vector.broadcast %c4_i32 : i32 to vector<2x128xi32>
    %176 = arith.select %173, %175, %140 : vector<2x128xi1>, vector<2x128xi32>
    %cst_124 = arith.constant 0.000000e+00 : f32
    %177 = vector.broadcast %cst_124 : f32 to vector<2x128xf32>
    %c5 = arith.constant 5 : index
    %178 = memref.load %arg4[%c5] : memref<7xf32, #tpu.memory_space<smem>>
    %179 = vector.broadcast %178 : f32 to vector<2x128xf32>
    %180 = arith.addf %177, %179 : vector<2x128xf32>
    %c0_125 = arith.constant 0 : index
    %c5_126 = arith.constant 5 : index
    %181 = memref.load %arg3[%c0_125, %c5_126] : memref<4x7xf32, #tpu.memory_space<smem>>
    %c0_127 = arith.constant 0 : index
    %c0_128 = arith.constant 0 : index
    %c0_129 = arith.constant 0 : index
    %c0_130 = arith.constant 0 : index
    %182 = vector.load %arg2[%c0_127, %c0_128, %c0_129, %c0_130] : memref<1x4x2x128xbf16, #tpu.memory_space<vmem>>, vector<1x1x2x128xbf16>
    %183 = vector.shape_cast %182 : vector<1x1x2x128xbf16> to vector<2x128xbf16>
    %184 = arith.extf %183 : vector<2x128xbf16> to vector<2x128xf32>
    %185 = vector.broadcast %181 : f32 to vector<2x128xf32>
    %186 = arith.mulf %185, %184 : vector<2x128xf32>
    %187 = arith.addf %180, %186 : vector<2x128xf32>
    %c1_131 = arith.constant 1 : index
    %c5_132 = arith.constant 5 : index
    %188 = memref.load %arg3[%c1_131, %c5_132] : memref<4x7xf32, #tpu.memory_space<smem>>
    %c0_133 = arith.constant 0 : index
    %c1_134 = arith.constant 1 : index
    %c0_135 = arith.constant 0 : index
    %c0_136 = arith.constant 0 : index
    %189 = vector.load %arg2[%c0_133, %c1_134, %c0_135, %c0_136] : memref<1x4x2x128xbf16, #tpu.memory_space<vmem>>, vector<1x1x2x128xbf16>
    %190 = vector.shape_cast %189 : vector<1x1x2x128xbf16> to vector<2x128xbf16>
    %191 = arith.extf %190 : vector<2x128xbf16> to vector<2x128xf32>
    %192 = vector.broadcast %188 : f32 to vector<2x128xf32>
    %193 = arith.mulf %192, %191 : vector<2x128xf32>
    %194 = arith.addf %187, %193 : vector<2x128xf32>
    %c2_137 = arith.constant 2 : index
    %c5_138 = arith.constant 5 : index
    %195 = memref.load %arg3[%c2_137, %c5_138] : memref<4x7xf32, #tpu.memory_space<smem>>
    %c0_139 = arith.constant 0 : index
    %c2_140 = arith.constant 2 : index
    %c0_141 = arith.constant 0 : index
    %c0_142 = arith.constant 0 : index
    %196 = vector.load %arg2[%c0_139, %c2_140, %c0_141, %c0_142] : memref<1x4x2x128xbf16, #tpu.memory_space<vmem>>, vector<1x1x2x128xbf16>
    %197 = vector.shape_cast %196 : vector<1x1x2x128xbf16> to vector<2x128xbf16>
    %198 = arith.extf %197 : vector<2x128xbf16> to vector<2x128xf32>
    %199 = vector.broadcast %195 : f32 to vector<2x128xf32>
    %200 = arith.mulf %199, %198 : vector<2x128xf32>
    %201 = arith.addf %194, %200 : vector<2x128xf32>
    %c3_143 = arith.constant 3 : index
    %c5_144 = arith.constant 5 : index
    %202 = memref.load %arg3[%c3_143, %c5_144] : memref<4x7xf32, #tpu.memory_space<smem>>
    %c0_145 = arith.constant 0 : index
    %c3_146 = arith.constant 3 : index
    %c0_147 = arith.constant 0 : index
    %c0_148 = arith.constant 0 : index
    %203 = vector.load %arg2[%c0_145, %c3_146, %c0_147, %c0_148] : memref<1x4x2x128xbf16, #tpu.memory_space<vmem>>, vector<1x1x2x128xbf16>
    %204 = vector.shape_cast %203 : vector<1x1x2x128xbf16> to vector<2x128xbf16>
    %205 = arith.extf %204 : vector<2x128xbf16> to vector<2x128xf32>
    %206 = vector.broadcast %202 : f32 to vector<2x128xf32>
    %207 = arith.mulf %206, %205 : vector<2x128xf32>
    %208 = arith.addf %201, %207 : vector<2x128xf32>
    %209 = arith.cmpf ogt, %208, %174 : vector<2x128xf32>
    %210 = arith.select %209, %208, %174 : vector<2x128xi1>, vector<2x128xf32>
    %c5_i32 = arith.constant 5 : i32
    %211 = vector.broadcast %c5_i32 : i32 to vector<2x128xi32>
    %212 = arith.select %209, %211, %176 : vector<2x128xi1>, vector<2x128xi32>
    %cst_149 = arith.constant 0.000000e+00 : f32
    %213 = vector.broadcast %cst_149 : f32 to vector<2x128xf32>
    %c6 = arith.constant 6 : index
    %214 = memref.load %arg4[%c6] : memref<7xf32, #tpu.memory_space<smem>>
    %215 = vector.broadcast %214 : f32 to vector<2x128xf32>
    %216 = arith.addf %213, %215 : vector<2x128xf32>
    %c0_150 = arith.constant 0 : index
    %c6_151 = arith.constant 6 : index
    %217 = memref.load %arg3[%c0_150, %c6_151] : memref<4x7xf32, #tpu.memory_space<smem>>
    %c0_152 = arith.constant 0 : index
    %c0_153 = arith.constant 0 : index
    %c0_154 = arith.constant 0 : index
    %c0_155 = arith.constant 0 : index
    %218 = vector.load %arg2[%c0_152, %c0_153, %c0_154, %c0_155] : memref<1x4x2x128xbf16, #tpu.memory_space<vmem>>, vector<1x1x2x128xbf16>
    %219 = vector.shape_cast %218 : vector<1x1x2x128xbf16> to vector<2x128xbf16>
    %220 = arith.extf %219 : vector<2x128xbf16> to vector<2x128xf32>
    %221 = vector.broadcast %217 : f32 to vector<2x128xf32>
    %222 = arith.mulf %221, %220 : vector<2x128xf32>
    %223 = arith.addf %216, %222 : vector<2x128xf32>
    %c1_156 = arith.constant 1 : index
    %c6_157 = arith.constant 6 : index
    %224 = memref.load %arg3[%c1_156, %c6_157] : memref<4x7xf32, #tpu.memory_space<smem>>
    %c0_158 = arith.constant 0 : index
    %c1_159 = arith.constant 1 : index
    %c0_160 = arith.constant 0 : index
    %c0_161 = arith.constant 0 : index
    %225 = vector.load %arg2[%c0_158, %c1_159, %c0_160, %c0_161] : memref<1x4x2x128xbf16, #tpu.memory_space<vmem>>, vector<1x1x2x128xbf16>
    %226 = vector.shape_cast %225 : vector<1x1x2x128xbf16> to vector<2x128xbf16>
    %227 = arith.extf %226 : vector<2x128xbf16> to vector<2x128xf32>
    %228 = vector.broadcast %224 : f32 to vector<2x128xf32>
    %229 = arith.mulf %228, %227 : vector<2x128xf32>
    %230 = arith.addf %223, %229 : vector<2x128xf32>
    %c2_162 = arith.constant 2 : index
    %c6_163 = arith.constant 6 : index
    %231 = memref.load %arg3[%c2_162, %c6_163] : memref<4x7xf32, #tpu.memory_space<smem>>
    %c0_164 = arith.constant 0 : index
    %c2_165 = arith.constant 2 : index
    %c0_166 = arith.constant 0 : index
    %c0_167 = arith.constant 0 : index
    %232 = vector.load %arg2[%c0_164, %c2_165, %c0_166, %c0_167] : memref<1x4x2x128xbf16, #tpu.memory_space<vmem>>, vector<1x1x2x128xbf16>
    %233 = vector.shape_cast %232 : vector<1x1x2x128xbf16> to vector<2x128xbf16>
    %234 = arith.extf %233 : vector<2x128xbf16> to vector<2x128xf32>
    %235 = vector.broadcast %231 : f32 to vector<2x128xf32>
    %236 = arith.mulf %235, %234 : vector<2x128xf32>
    %237 = arith.addf %230, %236 : vector<2x128xf32>
    %c3_168 = arith.constant 3 : index
    %c6_169 = arith.constant 6 : index
    %238 = memref.load %arg3[%c3_168, %c6_169] : memref<4x7xf32, #tpu.memory_space<smem>>
    %c0_170 = arith.constant 0 : index
    %c3_171 = arith.constant 3 : index
    %c0_172 = arith.constant 0 : index
    %c0_173 = arith.constant 0 : index
    %239 = vector.load %arg2[%c0_170, %c3_171, %c0_172, %c0_173] : memref<1x4x2x128xbf16, #tpu.memory_space<vmem>>, vector<1x1x2x128xbf16>
    %240 = vector.shape_cast %239 : vector<1x1x2x128xbf16> to vector<2x128xbf16>
    %241 = arith.extf %240 : vector<2x128xbf16> to vector<2x128xf32>
    %242 = vector.broadcast %238 : f32 to vector<2x128xf32>
    %243 = arith.mulf %242, %241 : vector<2x128xf32>
    %244 = arith.addf %237, %243 : vector<2x128xf32>
    %245 = arith.cmpf ogt, %244, %210 : vector<2x128xf32>
    %c6_i32 = arith.constant 6 : i32
    %246 = vector.broadcast %c6_i32 : i32 to vector<2x128xi32>
    %247 = arith.select %245, %246, %212 : vector<2x128xi1>, vector<2x128xi32>
    %c0_174 = arith.constant 0 : index
    %c0_175 = arith.constant 0 : index
    %c0_176 = arith.constant 0 : index
    %c0_177 = arith.constant 0 : index
    %248 = vector.load %arg5[%c0_174, %c0_175, %c0_176, %c0_177] : memref<1x1x2x128xi32, #tpu.memory_space<vmem>>, vector<1x1x2x128xi32>
    %249 = vector.shape_cast %248 : vector<1x1x2x128xi32> to vector<2x128xi32>
    %250 = vector.shape_cast %247 : vector<2x128xi32> to vector<1x1x2x128xi32>
    tpu.vector_store %arg5[%c0_174, %c0_175, %c0_176, %c0_177], %250 {strides = array<i32>} : memref<1x1x2x128xi32, #tpu.memory_space<vmem>>, vector<1x1x2x128xi32>,
    return
  }
  func.func @transform_0(%arg0: i32, %arg1: i32) -> (i32, i32, i32, i32) {
    %c0_i32 = arith.constant 0 : i32
    %c0_i32_0 = arith.constant 0 : i32
    %c0_i32_1 = arith.constant 0 : i32
    return %arg0, %c0_i32, %arg1, %c0_i32_0 : i32, i32, i32, i32
  }
  func.func @transform_1(%arg0: i32, %arg1: i32) -> (i32, i32) {
    %c0_i32 = arith.constant 0 : i32
    %c0_i32_0 = arith.constant 0 : i32
    %c0_i32_1 = arith.constant 0 : i32
    return %c0_i32, %c0_i32_0 : i32, i32
  }
  func.func @transform_2(%arg0: i32, %arg1: i32) -> i32 {
    %c0_i32 = arith.constant 0 : i32
    %c0_i32_0 = arith.constant 0 : i32
    return %c0_i32 : i32
  }
  func.func @transform_3(%arg0: i32, %arg1: i32) -> (i32, i32, i32, i32) {
    %c0_i32 = arith.constant 0 : i32
    %c0_i32_0 = arith.constant 0 : i32
    %c0_i32_1 = arith.constant 0 : i32
    return %arg0, %c0_i32, %arg1, %c0_i32_0 : i32, i32, i32, i32
  }
}

</mosaic_0001>

<llo_original>
// kernel: tpu_custom_call.1
$region0: #{tpu_custom_call.1}
  #allocation0 [shape = 'u32[]', space=smem, size = 0x4, offset = 0x4, fixed_abs, tag = 'smem constant byte address 0x4 - core index']
  #allocation1 [shape = 'u32[144,128]{1,0:T(1,128)}', space=vmem, size = 0x12000, scoped, tag = 'internal scratch']
  %s0 = inlined_call_operand.hbm [shape: bf16[2,4,2,128], index: 0, kind: input, shape index: {}]
  %s1 = inlined_call_operand.hbm [shape: f32[4,7], index: 1, kind: input, shape index: {}]
  %s2 = inlined_call_operand.vmem [shape: f32[7], index: 2, kind: input, shape index: {}]
  %s3 = inlined_call_operand.hbm [shape: s32[2,1,2,128], index: 3, kind: output, shape index: {}]
  %s4 = sld [smem:[#allocation0]]
  $region57: #{tpu_custom_call.1} parent=0
    _
  %s6 = ssub.s32 1, %s4
  %s7 = scalar_select 0, %s6, %s4
  $region1: #{tpu_custom_call.1} parent=0
    #allocation2 [shape = 'u8[4096]{0}', space=vmem, size = 0x1000, scoped, tag = 'input window, operand 0']
    #allocation3 [shape = 's32[2]{0}', space=sflag, size = 0x8, scoped, tag = 'scoped memory for tpu_custom_call.1']
    #allocation4 [shape = 's32[2]{0}', space=sflag, size = 0x8, scoped, tag = 'scoped memory for tpu_custom_call.1']
    #allocation5 [shape = 's32[2]{0}', space=sflag, size = 0x8, scoped, tag = 'scoped memory for tpu_custom_call.1']
    #allocation6 [shape = 's32[2]{0}', space=sflag, size = 0x8, scoped, tag = 'scoped memory for tpu_custom_call.1']
    #allocation7 [shape = 'u8[2048]{0}', space=smem, size = 0x800, scoped, tag = 'input window, operand 1, single buffered']
    #allocation8 [shape = 'u8[512]{0}', space=smem, size = 0x200, scoped, tag = 'input window, operand 2, single buffered']
    #allocation9 [shape = 'u8[2048]{0}', space=vmem, size = 0x800, scoped, tag = 'output window, operand 0']
    %8 = vsyncpa [#allocation3], 0
    %s9 = scalar_lea.sflag [#allocation3], 1
    %10 = vsyncpa %s9, 0
    %11 = vsyncpa [#allocation5], 0
    %12 = vsyncpa [#allocation6], 0
    %13 = vsyncpa [#allocation4], 0
    %s14 = scalar_lea.sflag [#allocation4], 1
    %15 = vsyncpa %s14, 0
    loop: start=0, step=1, limit=4
    $region2: #{tpu_custom_call.1} parent=1 // loop_pre_header
      _
    $region3: #{tpu_custom_call.1} parent=1 // loop_header
      %s17 = sphi 0, %s21
      %p18 = scmp.ge.s32.totalorder %s17, 4
      %s24 = sphi 0, %s36
      %s25 = sphi 0, %s32
      %s26 = sphi 0, %s24
      %s27 = sphi 0, %s25
      %s28 = sphi 0, %s26
      %s29 = sphi 0, %s27
      %s41 = sphi 0, %s43
      %s44 = sphi 0, %s41
      %s45 = sphi 0, %s44
      %s61 = sphi 0, %s45
      %s65 = sphi 0, %s65
      %s67 = sphi 0, %s65
      %s68 = sphi 0, %s67
      %s82 = sphi 0, %s68
      %s86 = sphi 0, %s86
      %s88 = sphi 0, %s86
      %s89 = sphi 0, %s88
      %s103 = sphi 0, %s89
      %s111 = sphi 0, %s113
      %s114 = sphi 0, %s111
      %s115 = sphi 0, %s114
      %s131 = sphi 0, %s115
    $region4: #{tpu_custom_call.1} parent=1 // loop_header_branch
      %20 = sbr.rel (%p18) target = $region8
    $region5: #{tpu_custom_call.1} parent=1 // loop_body
      %s22 = ssub.s32 %s17, 1
      %s23 = ssub.s32 %s17, 2
      %s30 = sadd.s32 1, %s25
      %p31 = scmp.ge.s32.totalorder %s30, 1
      %s32 = scalar_select %p31, 0, %s30
      %s33 = sadd.s32 1, %s24
      %s34 = scalar_select %p31, %s33, %s24
      %p35 = scmp.ge.s32.totalorder %s34, 2
      %s36 = scalar_select %p35, 0, %s34
      %s37 = ssub.s32 %s24, %s36
      %s38 = ssub.s32 %s25, %s32
      %s39 = sor.u32 %s37, %s38
      %p40 = scmp.eq.s32.totalorder %s39, 0
      %s42 = sadd.s32 %s41, 1
      %s43 = scalar_select %p40, %s41, %s42
      %p46 = pneg %p40
      %p47 = scmp.eq.s32.totalorder %s17, 1
      %p48 = por %p46, %p47
      %p49 = scmp.ne.s32.totalorder %s41, %s44
      %p50 = scmp.eq.s32.totalorder %s17, 0
      %p51 = por %p49, %p50
      %p52 = scmp.ne.s32.totalorder %s41, %s44
      %p53 = scmp.eq.s32.totalorder %s22, 1
      %p54 = por %p52, %p53
      %p55 = scmp.ne.s32.totalorder %s44, %s45
      %p56 = scmp.eq.s32.totalorder %s22, 0
      %p57 = por %p55, %p56
      %p58 = scmp.ne.s32.totalorder %s44, %s45
      %p59 = scmp.eq.s32.totalorder %s23, 1
      %p60 = por %p58, %p59
      %p62 = scmp.ne.s32.totalorder %s45, %s61
      %p63 = scmp.eq.s32.totalorder %s23, 0
      %p64 = por %p62, %p63
      %s66 = sadd.s32 %s65, 1
      %p69 = scmp.eq.s32.totalorder %s17, 1
      %p70 = scmp.ne.s32.totalorder %s65, %s67
      %p71 = scmp.eq.s32.totalorder %s17, 0
      %p72 = por %p70, %p71
      %p73 = scmp.ne.s32.totalorder %s65, %s67
      %p74 = scmp.eq.s32.totalorder %s22, 1
      %p75 = por %p73, %p74
      %p76 = scmp.ne.s32.totalorder %s67, %s68
      %p77 = scmp.eq.s32.totalorder %s22, 0
      %p78 = por %p76, %p77
      %p79 = scmp.ne.s32.totalorder %s67, %s68
      %p80 = scmp.eq.s32.totalorder %s23, 1
      %p81 = por %p79, %p80
      %p83 = scmp.ne.s32.totalorder %s68, %s82
      %p84 = scmp.eq.s32.totalorder %s23, 0
      %p85 = por %p83, %p84
      %s87 = sadd.s32 %s86, 1
      %p90 = scmp.eq.s32.totalorder %s17, 1
      %p91 = scmp.ne.s32.totalorder %s86, %s88
      %p92 = scmp.eq.s32.totalorder %s17, 0
      %p93 = por %p91, %p92
      %p94 = scmp.ne.s32.totalorder %s86, %s88
      %p95 = scmp.eq.s32.totalorder %s22, 1
      %p96 = por %p94, %p95
      %p97 = scmp.ne.s32.totalorder %s88, %s89
      %p98 = scmp.eq.s32.totalorder %s22, 0
      %p99 = por %p97, %p98
      %p100 = scmp.ne.s32.totalorder %s88, %s89
      %p101 = scmp.eq.s32.totalorder %s23, 1
      %p102 = por %p100, %p101
      %p104 = scmp.ne.s32.totalorder %s89, %s103
      %p105 = scmp.eq.s32.totalorder %s23, 0
      %p106 = por %p104, %p105
      %s107 = ssub.s32 %s24, %s36
      %s108 = ssub.s32 %s25, %s32
      %s109 = sor.u32 %s107, %s108
      %p110 = scmp.eq.s32.totalorder %s109, 0
      %s112 = sadd.s32 %s111, 1
      %s113 = scalar_select %p110, %s111, %s112
      %p116 = pneg %p110
      %p117 = scmp.eq.s32.totalorder %s17, 1
      %p118 = por %p116, %p117
      %p119 = scmp.ne.s32.totalorder %s111, %s114
      %p120 = scmp.eq.s32.totalorder %s17, 0
      %p121 = por %p119, %p120
      %p122 = scmp.ne.s32.totalorder %s111, %s114
      %p123 = scmp.eq.s32.totalorder %s22, 1
      %p124 = por %p122, %p123
      %p125 = scmp.ne.s32.totalorder %s114, %s115
      %p126 = scmp.eq.s32.totalorder %s22, 0
      %p127 = por %p125, %p126
      %p128 = scmp.ne.s32.totalorder %s114, %s115
      %p129 = scmp.eq.s32.totalorder %s23, 1
      %p130 = por %p128, %p129
      %p132 = scmp.ne.s32.totalorder %s115, %s131
      %p133 = scmp.eq.s32.totalorder %s23, 0
      %p134 = por %p132, %p133
      %p135 = scmp.le.s32.totalorder 1, %s17
      %p136 = scmp.lt.s32.totalorder %s17, 3
      %p137 = pnand %p135, %p136
      %p138 = pneg %p137
      // Predicated region
      $region9: #{tpu_custom_call.1} parent=5 // pred_check
        _
      $region10: #{tpu_custom_call.1} parent=5 // pred_check_branch
        %140 = sbr.rel (%p137) target = $region12
      $region11: #{tpu_custom_call.1} parent=5 // pred_region
        %s141 = ssub.s32 %s17, 1
        // Predicated region
        $region13: #{tpu_custom_call.1} parent=11 // pred_check
          %p142 = pneg %p78
        $region14: #{tpu_custom_call.1} parent=11 // pred_check_branch
          %144 = sbr.rel (%p142) target = $region16
        $region15: #{tpu_custom_call.1} parent=11 // pred_region
          %s146 = ssub.s32 64, 64
          %147 = vsyncadd [#allocation5], %s146
          %150 = dma.hbm_to_smem %s1, 64, [#allocation7], [#allocation5]
        $region16: #{tpu_custom_call.1} parent=11 // pred_fallthru
          _
        // Predicated region
        $region17: #{tpu_custom_call.1} parent=11 // pred_check
          %p151 = pneg %p99
        $region18: #{tpu_custom_call.1} parent=11 // pred_check_branch
          %153 = sbr.rel (%p151) target = $region20
        $region19: #{tpu_custom_call.1} parent=11 // pred_region
          %s155 = ssub.s32 16, 16
          %156 = vsyncadd [#allocation6], %s155
          %s158 = sshll.u32 %s2, 4
          %s159 = int_to_ptr.vmem [resolvable:$true] %s158
          %161 = dma.vmem_to_smem %s159, 16, [#allocation8], [#allocation6]
        $region20: #{tpu_custom_call.1} parent=11 // pred_fallthru
          _
      $region12: #{tpu_custom_call.1} parent=5 // pred_fallthru
        _
      %p162 = scmp.lt.s32.totalorder %s17, 2
      // Predicated region
      $region21: #{tpu_custom_call.1} parent=5 // pred_check
        %p163 = pneg %p162
      $region22: #{tpu_custom_call.1} parent=5 // pred_check_branch
        %165 = sbr.rel (%p163) target = $region24
      $region23: #{tpu_custom_call.1} parent=5 // pred_region
        // Predicated region
        $region25: #{tpu_custom_call.1} parent=23 // pred_check
          %p166 = pneg %p51
        $region26: #{tpu_custom_call.1} parent=23 // pred_check_branch
          %168 = sbr.rel (%p166) target = $region28
        $region27: #{tpu_custom_call.1} parent=23 // pred_region
          %s169 = sand.u32 %s41, 1
          %s170 = scalar_lea.sflag [#allocation3], %s169
          %s171 = sand.u32 %s41, 1
          %s172 = smul.addr %s171, 4
          %s173 = scalar_lea.vmem [#allocation2], %s172
          %s175 = ssub.s32 64, 64
          %176 = vsyncadd %s170, %s175
          %s177 = smul.addr %s24, 4
          %s178 = sadd.s32 %s25, %s177
          %s179 = smul.addr %s178, 16
          %s180 = scalar_lea.hbm %s0, %s179
          %s181 = sshll.u32 %s173, 4
          %s182 = int_to_ptr.vmem [resolvable:$true] %s181
          %187 = dma.hbm_to_vmem [thread:$0]  %s180, 64, %s182, %s170, 16, 16, 1
        $region28: #{tpu_custom_call.1} parent=23 // pred_fallthru
          _
      $region24: #{tpu_custom_call.1} parent=5 // pred_fallthru
        _
      %p188 = scmp.le.s32.totalorder 1, %s17
      %p189 = scmp.lt.s32.totalorder %s17, 3
      %p190 = pnand %p188, %p189
      %p191 = pneg %p190
      // Predicated region
      $region29: #{tpu_custom_call.1} parent=5 // pred_check
        _
      $region30: #{tpu_custom_call.1} parent=5 // pred_check_branch
        %193 = sbr.rel (%p190) target = $region32
      $region31: #{tpu_custom_call.1} parent=5 // pred_region
        %s194 = ssub.s32 %s17, 1
        %s195 = sand.u32 %s44, 1
        %s196 = scalar_lea.sflag [#allocation3], %s195
        %s197 = sand.u32 %s44, 1
        %s198 = smul.addr %s197, 4
        %s199 = scalar_lea.vmem [#allocation2], %s198
        // Predicated region
        $region33: #{tpu_custom_call.1} parent=31 // pred_check
          %p200 = pneg %p57
        $region34: #{tpu_custom_call.1} parent=31 // pred_check_branch
          %202 = sbr.rel (%p200) target = $region36
        $region35: #{tpu_custom_call.1} parent=31 // pred_region
          %203 = dma.done %s196, 64
        $region36: #{tpu_custom_call.1} parent=31 // pred_fallthru
          _
        // Predicated region
        $region37: #{tpu_custom_call.1} parent=31 // pred_check
          %p204 = pneg %p78
        $region38: #{tpu_custom_call.1} parent=31 // pred_check_branch
          %206 = sbr.rel (%p204) target = $region40
        $region39: #{tpu_custom_call.1} parent=31 // pred_region
          %207 = dma.done [#allocation5], 64
        $region40: #{tpu_custom_call.1} parent=31 // pred_fallthru
          _
        // Predicated region
        $region41: #{tpu_custom_call.1} parent=31 // pred_check
          %p208 = pneg %p99
        $region42: #{tpu_custom_call.1} parent=31 // pred_check_branch
          %210 = sbr.rel (%p208) target = $region44
        $region43: #{tpu_custom_call.1} parent=31 // pred_region
          %211 = dma.done [#allocation6], 16
        $region44: #{tpu_custom_call.1} parent=31 // pred_fallthru
          _
        %212 = sfence
        %s213 = sand.u32 %s44, 1
        %s214 = scalar_lea.sflag [#allocation3], %s213
        %s215 = sand.u32 %s44, 1
        %s216 = smul.addr %s215, 4
        %s217 = scalar_lea.vmem [#allocation2], %s216
        %p218 = pneg %p57
        %p219 = pneg %p54
        %p220 = pneg %p78
        %p221 = pneg %p75
        %p222 = pneg %p99
        %p223 = pneg %p96
        %p224 = pneg %p127
        %p225 = pneg %p124
        %s226 = sand.u32 %s114, 1
        %s227 = scalar_lea.sflag [#allocation4], %s226
        %s228 = sand.u32 %s114, 1
        %s229 = smul.addr %s228, 2
        %s230 = scalar_lea.vmem [#allocation9], %s229
        %s231 = sld [smem:[#allocation8]]
        %v232 = vstv %s231
        %v233 = vadd.f32 %v232, 0.0
        %s234 = sld [smem:[#allocation7]]
        %v235 = vld [vmem:[%s199] sm:$0x1]
        %v236 = vunpack.c.l.bf16 %v235
        %v237 = vstv %s234
        %v238 = vmul.f32 %v237, %v236
        %v239 = vadd.f32 %v233, %v238
        %s240 = sld [smem:[#allocation7 + $0x80]]
        %s241 = scalar_lea.vmem %s199, 1 [#allocation2]
        %v242 = vld [vmem:[%s241] sm:$0x1]
        %v243 = vunpack.c.l.bf16 %v242
        %v244 = vstv %s240
        %v245 = vmul.f32 %v244, %v243
        %v246 = vadd.f32 %v239, %v245
        %s247 = sld [smem:[#allocation7 + $0x100]]
        %s248 = scalar_lea.vmem %s199, 2 [#allocation2]
        %v249 = vld [vmem:[%s248] sm:$0x1]
        %v250 = vunpack.c.l.bf16 %v249
        %v251 = vstv %s247
        %v252 = vmul.f32 %v251, %v250
        %v253 = vadd.f32 %v246, %v252
        %s254 = sld [smem:[#allocation7 + $0x180]]
        %s255 = scalar_lea.vmem %s199, 3 [#allocation2]
        %v256 = vld [vmem:[%s255] sm:$0x1]
        %v257 = vunpack.c.l.bf16 %v256
        %v258 = vstv %s254
        %v259 = vmul.f32 %v258, %v257
        %v260 = vadd.f32 %v253, %v259
        %s261 = sld [smem:[#allocation8 + $0x1]]
        %v262 = vstv %s261
        %v263 = vadd.f32 %v262, 0.0
        %s264 = sld [smem:[#allocation7 + $0x1]]
        %v265 = vstv %s264
        %v266 = vmul.f32 %v265, %v236
        %v267 = vadd.f32 %v263, %v266
        %s268 = sld [smem:[#allocation7 + $0x81]]
        %v269 = vstv %s268
        %v270 = vmul.f32 %v269, %v243
        %v271 = vadd.f32 %v267, %v270
        %s272 = sld [smem:[#allocation7 + $0x101]]
        %v273 = vstv %s272
        %v274 = vmul.f32 %v273, %v250
        %v275 = vadd.f32 %v271, %v274
        %s276 = sld [smem:[#allocation7 + $0x181]]
        %v277 = vstv %s276
        %v278 = vmul.f32 %v277, %v257
        %v279 = vadd.f32 %v275, %v278
        %vm280 = vcmp.gt.f32.partialorder %v279, %v260
        %v281 = vsel %vm280, %v279, %v260
        %v282 = vsel %vm280, 1, 0
        %s283 = sld [smem:[#allocation8 + $0x2]]
        %v284 = vstv %s283
        %v285 = vadd.f32 %v284, 0.0
        %s286 = sld [smem:[#allocation7 + $0x2]]
        %v287 = vstv %s286
        %v288 = vmul.f32 %v287, %v236
        %v289 = vadd.f32 %v285, %v288
        %s290 = sld [smem:[#allocation7 + $0x82]]
        %v291 = vstv %s290
        %v292 = vmul.f32 %v291, %v243
        %v293 = vadd.f32 %v289, %v292
        %s294 = sld [smem:[#allocation7 + $0x102]]
        %v295 = vstv %s294
        %v296 = vmul.f32 %v295, %v250
        %v297 = vadd.f32 %v293, %v296
        %s298 = sld [smem:[#allocation7 + $0x182]]
        %v299 = vstv %s298
        %v300 = vmul.f32 %v299, %v257
        %v301 = vadd.f32 %v297, %v300
        %vm302 = vcmp.gt.f32.partialorder %v301, %v281
        %v303 = vsel %vm302, %v301, %v281
        %v304 = vsel %vm302, 2, %v282
        %s305 = sld [smem:[#allocation8 + $0x3]]
        %v306 = vstv %s305
        %v307 = vadd.f32 %v306, 0.0
        %s308 = sld [smem:[#allocation7 + $0x3]]
        %v309 = vstv %s308
        %v310 = vmul.f32 %v309, %v236
        %v311 = vadd.f32 %v307, %v310
        %s312 = sld [smem:[#allocation7 + $0x83]]
        %v313 = vstv %s312
        %v314 = vmul.f32 %v313, %v243
        %v315 = vadd.f32 %v311, %v314
        %s316 = sld [smem:[#allocation7 + $0x103]]
        %v317 = vstv %s316
        %v318 = vmul.f32 %v317, %v250
        %v319 = vadd.f32 %v315, %v318
        %s320 = sld [smem:[#allocation7 + $0x183]]
        %v321 = vstv %s320
        %v322 = vmul.f32 %v321, %v257
        %v323 = vadd.f32 %v319, %v322
        %vm324 = vcmp.gt.f32.partialorder %v323, %v303
        %v325 = vsel %vm324, %v323, %v303
        %v326 = vsel %vm324, 3, %v304
        %s327 = sld [smem:[#allocation8 + $0x4]]
        %v328 = vstv %s327
        %v329 = vadd.f32 %v328, 0.0
        %s330 = sld [smem:[#allocation7 + $0x4]]
        %v331 = vstv %s330
        %v332 = vmul.f32 %v331, %v236
        %v333 = vadd.f32 %v329, %v332
        %s334 = sld [smem:[#allocation7 + $0x84]]
        %v335 = vstv %s334
        %v336 = vmul.f32 %v335, %v243
        %v337 = vadd.f32 %v333, %v336
        %s338 = sld [smem:[#allocation7 + $0x104]]
        %v339 = vstv %s338
        %v340 = vmul.f32 %v339, %v250
        %v341 = vadd.f32 %v337, %v340
        %s342 = sld [smem:[#allocation7 + $0x184]]
        %v343 = vstv %s342
        %v344 = vmul.f32 %v343, %v257
        %v345 = vadd.f32 %v341, %v344
        %vm346 = vcmp.gt.f32.partialorder %v345, %v325
        %v347 = vsel %vm346, %v345, %v325
        %v348 = vsel %vm346, 4, %v326
        %s349 = sld [smem:[#allocation8 + $0x5]]
        %v350 = vstv %s349
        %v351 = vadd.f32 %v350, 0.0
        %s352 = sld [smem:[#allocation7 + $0x5]]
        %v353 = vstv %s352
        %v354 = vmul.f32 %v353, %v236
        %v355 = vadd.f32 %v351, %v354
        %s356 = sld [smem:[#allocation7 + $0x85]]
        %v357 = vstv %s356
        %v358 = vmul.f32 %v357, %v243
        %v359 = vadd.f32 %v355, %v358
        %s360 = sld [smem:[#allocation7 + $0x105]]
        %v361 = vstv %s360
        %v362 = vmul.f32 %v361, %v250
        %v363 = vadd.f32 %v359, %v362
        %s364 = sld [smem:[#allocation7 + $0x185]]
        %v365 = vstv %s364
        %v366 = vmul.f32 %v365, %v257
        %v367 = vadd.f32 %v363, %v366
        %vm368 = vcmp.gt.f32.partialorder %v367, %v347
        %v369 = vsel %vm368, %v367, %v347
        %v370 = vsel %vm368, 5, %v348
        %s371 = sld [smem:[#allocation8 + $0x6]]
        %v372 = vstv %s371
        %v373 = vadd.f32 %v372, 0.0
        %s374 = sld [smem:[#allocation7 + $0x6]]
        %v375 = vstv %s374
        %v376 = vmul.f32 %v375, %v236
        %v377 = vadd.f32 %v373, %v376
        %s378 = sld [smem:[#allocation7 + $0x86]]
        %v379 = vstv %s378
        %v380 = vmul.f32 %v379, %v243
        %v381 = vadd.f32 %v377, %v380
        %s382 = sld [smem:[#allocation7 + $0x106]]
        %v383 = vstv %s382
        %v384 = vmul.f32 %v383, %v250
        %v385 = vadd.f32 %v381, %v384
        %s386 = sld [smem:[#allocation7 + $0x186]]
        %v387 = vstv %s386
        %v388 = vmul.f32 %v387, %v257
        %v389 = vadd.f32 %v385, %v388
        %vm390 = vcmp.gt.f32.partialorder %v389, %v369
        %v391 = vsel %vm390, 6, %v370
        %392 = vst [vmem:[%s230] sm:$0x3] %v391
        %s393 = sand.u32 %s114, 1
        %s394 = scalar_lea.sflag [#allocation4], %s393
        %s395 = sand.u32 %s114, 1
        %s396 = smul.addr %s395, 2
        %s397 = scalar_lea.vmem [#allocation9], %s396
        // Predicated region
        $region45: #{tpu_custom_call.1} parent=31 // pred_check
          %p398 = pneg %p124
        $region46: #{tpu_custom_call.1} parent=31 // pred_check_branch
          %400 = sbr.rel (%p398) target = $region48
        $region47: #{tpu_custom_call.1} parent=31 // pred_region
          %s402 = ssub.s32 32, 32
          %403 = vsyncadd %s394, %s402
          %s404 = sadd.s32 %s27, %s26
          %s405 = smul.addr %s404, 32
          %s406 = scalar_lea.hbm %s3, %s405
          %s408 = sshll.u32 %s397, 4
          %s409 = int_to_ptr.vmem [resolvable:$true] %s408
          %411 = dma.vmem_to_hbm [thread:$0]  %s409, 32, %s406, %s394
        $region48: #{tpu_custom_call.1} parent=31 // pred_fallthru
          _
      $region32: #{tpu_custom_call.1} parent=5 // pred_fallthru
        _
      %p412 = scmp.le.s32.totalorder 2, %s17
      // Predicated region
      $region49: #{tpu_custom_call.1} parent=5 // pred_check
        %p413 = pneg %p412
      $region50: #{tpu_custom_call.1} parent=5 // pred_check_branch
        %415 = sbr.rel (%p413) target = $region52
      $region51: #{tpu_custom_call.1} parent=5 // pred_region
        %s416 = ssub.s32 %s17, 2
        // Predicated region
        $region53: #{tpu_custom_call.1} parent=51 // pred_check
          %p417 = pneg %p130
        $region54: #{tpu_custom_call.1} parent=51 // pred_check_branch
          %419 = sbr.rel (%p417) target = $region56
        $region55: #{tpu_custom_call.1} parent=51 // pred_region
          %s420 = sand.u32 %s115, 1
          %s421 = scalar_lea.sflag [#allocation4], %s420
          %s422 = sand.u32 %s115, 1
          %s423 = smul.addr %s422, 2
          %s424 = scalar_lea.vmem [#allocation9], %s423
          %425 = dma.done %s421, 32
        $region56: #{tpu_custom_call.1} parent=51 // pred_fallthru
          _
      $region52: #{tpu_custom_call.1} parent=5 // pred_fallthru
        _
    $region6: #{tpu_custom_call.1} parent=1 // loop_footer
      %s21 = sadd.s32 1, %s17
    $region7: #{tpu_custom_call.1} parent=1 // loop_footer_branch
      %16 = sbr.rel target = $region3
    $region8: #{tpu_custom_call.1} parent=1 // loop_exit
      _
    %426 = vsyncpa [#allocation3], 1
    %s427 = scalar_lea.sflag [#allocation3], 1
    %428 = vsyncpa %s427, 1
    %429 = vsyncpa [#allocation4], 1
    %s430 = scalar_lea.sflag [#allocation4], 1
    %431 = vsyncpa %s430, 1
    %432 = vsyncpa [#allocation5], 1
    %s433 = scalar_lea.sflag [#allocation5], 1
    %434 = vsyncpa %s433, 1
    %435 = vsyncpa [#allocation6], 1
    %s436 = scalar_lea.sflag [#allocation6], 1
    %437 = vsyncpa %s436, 1

</llo_original>
